<compile_context>
chip_gen: v7x
topology: tpu7x:2x2x1
jax: 0.10.0
libtpu: 0.0.40
codegen_flags: <defaults>
</compile_context>

<pallas_src>
import functools

import jax
import jax.numpy as jnp
import numpy as np
from jax.experimental import pallas as pl
from jax.experimental.pallas import tpu as pltpu


# ----------------------------------------------------------------------------
# Shared in-kernel helpers
# ----------------------------------------------------------------------------
def _concat_elu_halves(v):
    """Returns (elu(v), elu(-v)) using a single exp per element.

    exp(-|v|) - 1 is the negative-branch value of whichever half has a
    negative argument; the other half takes the identity branch.  One EUP exp
    instead of two, and the exp argument is always <= 0 (no overflow).
    """
    e = jnp.exp(-jnp.abs(v)) - 1.0
    pos = v > 0
    return jnp.where(pos, v, e), jnp.where(pos, e, -v)


def _glu(a, b, approx):
    den = 1.0 + jnp.exp(-b)
    if approx:
        # EUP approximate reciprocal: only in the bf16 perf path.
        return a * pl.reciprocal(den, approx=True)
    return a / den


# ----------------------------------------------------------------------------
# Fat-lane path (small channel count: W*C <= 128)
# ----------------------------------------------------------------------------
def _make_fat_kernel(NB, H, W, C, Ca, mxu_dtype, approx_recip):
    M = NB * H                  # matmul rows = image rows in the block
    WC = W * C                  # fat activation width (lanes)
    WpC = (W + 2) * C           # fat padded-row width
    K3 = 2 * WpC                # folded conv K (elu(x) | elu(-x))
    has_aux = Ca is not None

    def body(x_ref, aux_ref, w3_ref, b3_ref, wa_ref, wg_ref, bg_ref, o_ref):
        xf = x_ref[...]                                    # (NB, H+2, WpC) f32
        ep, en = _concat_elu_halves(xf)
        # Single cast + lane-concat -> one folded LHS for all conv taps.
        exc = jnp.concatenate([ep.astype(mxu_dtype), en.astype(mxu_dtype)],
                              axis=-1)                     # (NB, H+2, K3)

        # 3x3 weight-norm conv as 3 banded matmuls (one per dy), folded K.
        h = None
        for dy in range(3):
            lhs = exc[:, dy:dy + H, :].reshape(M, K3)
            d = jnp.dot(lhs, w3_ref[dy], preferred_element_type=jnp.float32)
            h = d if h is None else h + d
        h = h + b3_ref[...]                # conv bias (+ aux bias pre-folded)

        # Optional aux branch: folded 1x1 conv as one block-diagonal matmul.
        if has_aux:
            ap, an = _concat_elu_halves(aux_ref[...])      # (NB, H, W*Ca)
            alhs = jnp.concatenate([ap.astype(mxu_dtype), an.astype(mxu_dtype)],
                                   axis=-1).reshape(M, 2 * W * Ca)
            h = h + jnp.dot(alhs, wa_ref[...],
                            preferred_element_type=jnp.float32)

        # Gate: folded 1x1 conv (2C -> 2C) as one 128-lane matmul, then GLU.
        hp, hn = _concat_elu_halves(h)
        glhs = jnp.concatenate([hp.astype(mxu_dtype), hn.astype(mxu_dtype)],
                               axis=-1)                    # (M, 2*WC)
        y = (jnp.dot(glhs, wg_ref[...], preferred_element_type=jnp.float32)
             + bg_ref[...])                                # (M, 2*WC)
        out = _glu(y[:, :WC], y[:, WC:], approx_recip)
        o_ref[...] = out.reshape(NB, H, WC).astype(o_ref.dtype)

    if has_aux:
        def kernel(x_ref, aux_ref, w3, b3, wa, wg, bg, o_ref):
            body(x_ref, aux_ref, w3, b3, wa, wg, bg, o_ref)
    else:
        def kernel(x_ref, w3, b3, wg, bg, o_ref):
            body(x_ref, None, w3, b3, None, wg, bg, o_ref)
    return kernel


def _expand_fat_params(params, *, W, C, Ca, mxu_dtype):
    """Fat-lane banded / block-diagonal weights with elu halves K-folded."""
    f32 = jnp.float32
    eye_w = jnp.eye(W, dtype=f32)

    # --- 3x3 conv -> per-dy banded matrices, then K-fold the two elu halves.
    w3 = params["w3"].astype(f32)                        # (3, 3, 2C, C) HWIO

    def band(w_half):                                    # (3,3,C,C)->(3,WpC,WC)
        mats = []
        for dy in range(3):
            m = sum(jnp.kron(jnp.eye(W + 2, W, k=-dx, dtype=f32),
                             w_half[dy, dx]) for dx in range(3))
            mats.append(m)
        return jnp.stack(mats)

    w3f = jnp.concatenate([band(w3[:, :, :C, :]),        # rows for elu(x)
                           band(w3[:, :, C:, :])], axis=1)   # rows for elu(-x)

    b3 = jnp.tile(params["b3"].reshape(-1), W)
    if Ca is not None:
        b3 = b3 + jnp.tile(params["ba"].reshape(-1), W)  # fold aux bias in
    out = {
        "w3": w3f.astype(mxu_dtype),                     # (3, 2*(W+2)*C, W*C)
        "b3": b3.reshape(1, W * C).astype(f32),
    }

    # --- gate 1x1 conv: block-diagonal, output lanes ordered [a | b], K-fold.
    wg = params["wg"].astype(f32)                        # (2C, 2C) [in, out]

    def gate_fat(w_half):                                # (C, 2C)->(WC, 2*WC)
        return jnp.concatenate([jnp.kron(eye_w, w_half[:, :C]),
                                jnp.kron(eye_w, w_half[:, C:])], axis=1)

    out["wg"] = jnp.concatenate([gate_fat(wg[:C]), gate_fat(wg[C:])],
                                axis=0).astype(mxu_dtype)    # (2*WC, 2*WC)
    bg = params["bg"].reshape(-1)
    out["bg"] = jnp.concatenate(
        [jnp.tile(bg[:C], W), jnp.tile(bg[C:], W)]).reshape(
            1, 2 * W * C).astype(f32)

    # --- aux 1x1 conv: block-diagonal, K-fold.
    if Ca is not None:
        wa = params["wa"].astype(f32)                    # (2Ca, C)
        out["wa"] = jnp.concatenate([jnp.kron(eye_w, wa[:Ca]),
                                     jnp.kron(eye_w, wa[Ca:])],
                                    axis=0).astype(mxu_dtype)  # (2*W*Ca, W*C)
    return out


def _num_tensorcores_per_device():
    """Best-effort TensorCore-per-device count (v4/v5p megacore, v7x -> 2)."""
    try:
        kind = jax.devices()[0].device_kind.lower()
    except Exception:
        return 1
    if "v4" in kind or "v5p" in kind or "7" in kind:
        return 2
    return 1


def _fat_vmem_bytes(NB, H, W, C, Ca, mxu_bytes):
    """Explicit VMEM model: expanded weights + double-buffered I/O + temps."""
    M = NB * H
    WC = W * C
    K3 = 2 * (W + 2) * C
    w = (3 * K3 * WC + (2 * WC) * (2 * WC)) * mxu_bytes + 3 * WC * 4
    io = 2 * NB * (H + 2) * (W + 2) * C * 4 + 2 * NB * H * WC * 4  # 2x dbl-buf
    inter = (NB * (H + 2) * K3 * (8 + mxu_bytes)      # elu halves + folded LHS
             + 3 * M * K3 * mxu_bytes                 # dy window copies
             + M * 2 * WC * (12 + mxu_bytes)          # h halves, gate LHS, y
             + M * WC * 8)                            # GLU temps
    if Ca is not None:
        KA = 2 * W * Ca
        w += KA * WC * mxu_bytes
        io += 2 * NB * H * W * Ca * 4
        inter += NB * H * KA * (8 + mxu_bytes)
    return int(w + io + 2 * inter)                    # 2x fudge for compiler


def _pick_block_batch(N, H, W, C, Ca, mxu_bytes, num_tc,
                      budget_bytes=40 * 2**20):
    """Images per grid step: big M, but grid >= #TensorCores and VMEM-safe."""
    feasible = []
    for nb in range(1, N + 1):
        if N % nb:
            continue
        # Keep at least one grid step per TensorCore (v7x / megacore chips).
        if num_tc > 1 and N >= num_tc and (N // nb) < num_tc:
            continue
        if _fat_vmem_bytes(nb, H, W, C, Ca, mxu_bytes) > budget_bytes:
            continue
        feasible.append(nb)
    if not feasible:
        return 1
    # Prefer M = NB*H a multiple of 256 (full MXU rows) when batch allows.
    aligned = [nb for nb in feasible if (nb * H) % 256 == 0]
    return max(aligned) if aligned else max(feasible)


def _full_spec(arr):
    zeros = (0,) * arr.ndim
    return pl.BlockSpec(arr.shape, lambda i: zeros)


def _gated_conv_fat(x, params, aux, mxu_dtype):
    N, H, W, C = x.shape
    has_aux = aux is not None
    Ca = aux.shape[-1] if has_aux else None
    mxu_bytes = jnp.dtype(mxu_dtype).itemsize
    approx_recip = jnp.dtype(mxu_dtype) != jnp.dtype(jnp.float32)

    num_tc = _num_tensorcores_per_device()
    NB = _pick_block_batch(N, H, W, C, Ca, mxu_bytes, num_tc)
    grid = (N // NB,)
    WC, WpC = W * C, (W + 2) * C

    # Pad once in XLA; present rows in the fat-lane layout (free reshape).
    xpad = jnp.pad(x, ((0, 0), (1, 1), (1, 1), (0, 0))).reshape(N, H + 2, WpC)
    fp = _expand_fat_params(params, W=W, C=C, Ca=Ca, mxu_dtype=mxu_dtype)

    in_specs = [pl.BlockSpec((NB, H + 2, WpC), lambda i: (i, 0, 0))]
    inputs = [xpad]
    if has_aux:
        in_specs.append(pl.BlockSpec((NB, H, W * Ca), lambda i: (i, 0, 0)))
        inputs.append(aux.reshape(N, H, W * Ca))
        weights = [fp["w3"], fp["b3"], fp["wa"], fp["wg"], fp["bg"]]
    else:
        weights = [fp["w3"], fp["b3"], fp["wg"], fp["bg"]]
    in_specs += [_full_spec(w) for w in weights]
    inputs += weights

    est = _fat_vmem_bytes(NB, H, W, C, Ca, mxu_bytes)
    vmem_limit = int(min(max(2 * est, 32 * 2**20), 48 * 2**20))  # v7x-safe cap

    kernel = _make_fat_kernel(NB, H, W, C, Ca, mxu_dtype, approx_recip)
    out = pl.pallas_call(
        kernel,
        out_shape=jax.ShapeDtypeStruct((N, H, WC), x.dtype),
        grid=grid,
        in_specs=in_specs,
        out_specs=pl.BlockSpec((NB, H, WC), lambda i: (i, 0, 0)),
        compiler_params=pltpu.CompilerParams(
            dimension_semantics=("parallel",),
            vmem_limit_bytes=vmem_limit),
    )(*inputs)
    return out.reshape(N, H, W, C)


# ----------------------------------------------------------------------------
# Plain-layout fallback path (W*C > 128: channels are already lane-dense)
# ----------------------------------------------------------------------------
def _plain_vmem_bytes(H, W, C, Ca, mxu_bytes):
    hw2 = (H + 2) * (W + 2)
    io = 2 * hw2 * C * 4 + 2 * H * W * C * 4
    w = (9 * 2 * C * C + 2 * C * 2 * C) * mxu_bytes + 3 * C * 4
    inter = (hw2 * 2 * C * (8 + mxu_bytes) + 3 * H * (W + 2) * C * 4
             + H * W * 2 * C * (12 + mxu_bytes) + H * W * C * 8)
    if Ca is not None:
        io += 2 * H * W * Ca * 4
        w += 2 * Ca * C * mxu_bytes
        inter += H * W * 2 * Ca * (8 + mxu_bytes)
    return int(w + io + 2 * inter)


def _make_plain_kernel(H, W, C, Ca, mxu_dtype, approx_recip):
    has_aux = Ca is not None

    def body(x_ref, aux_ref, w3_ref, b3_ref, wa_ref, wg_ref, bg_ref, o_ref):
        xf = x_ref[0]                                      # (H+2, W+2, C)
        ep, en = _concat_elu_halves(xf)
        exc = jnp.concatenate([ep.astype(mxu_dtype), en.astype(mxu_dtype)],
                              axis=-1)                     # (H+2, W+2, 2C)

        acc = jnp.zeros((H, W, C), jnp.float32)
        for dy in range(3):
            # Matmul over the full padded width keeps reshapes contiguous;
            # the (W+2)/W extra rows are cheap MXU waste, no relayouts.
            slab = exc[dy:dy + H].reshape(H * (W + 2), 2 * C)
            for dx in range(3):
                part = jnp.dot(slab, w3_ref[dy, dx],
                               preferred_element_type=jnp.float32)
                acc = acc + part.reshape(H, W + 2, C)[:, dx:dx + W, :]
        h = acc + b3_ref[...]

        if has_aux:
            ap, an = _concat_elu_halves(aux_ref[0])        # (H, W, Ca)
            aexc = jnp.concatenate([ap.astype(mxu_dtype), an.astype(mxu_dtype)],
                                   axis=-1).reshape(H * W, 2 * Ca)
            h = h + jnp.dot(aexc, wa_ref[...],
                            preferred_element_type=jnp.float32
                            ).reshape(H, W, C)

        hp, hn = _concat_elu_halves(h)
        gexc = jnp.concatenate([hp.astype(mxu_dtype), hn.astype(mxu_dtype)],
                               axis=-1).reshape(H * W, 2 * C)
        y = jnp.dot(gexc, wg_ref[...], preferred_element_type=jnp.float32)
        y = y.reshape(H, W, 2 * C) + bg_ref[...]
        out = _glu(y[..., :C], y[..., C:], approx_recip)
        o_ref[0] = out.astype(o_ref.dtype)

    if has_aux:
        def kernel(x_ref, aux_ref, w3, b3, wa, wg, bg, o_ref):
            body(x_ref, aux_ref, w3, b3, wa, wg, bg, o_ref)
    else:
        def kernel(x_ref, w3, b3, wg, bg, o_ref):
            body(x_ref, None, w3, b3, None, wg, bg, o_ref)
    return kernel


def _gated_conv_plain(x, params, aux, mxu_dtype):
    # TODO(synk): add halo'd H-row tiling for very large H*W images.
    N, H, W, C = x.shape
    has_aux = aux is not None
    Ca = aux.shape[-1] if has_aux else None
    mxu_bytes = jnp.dtype(mxu_dtype).itemsize
    approx_recip = jnp.dtype(mxu_dtype) != jnp.dtype(jnp.float32)

    xpad = jnp.pad(x, ((0, 0), (1, 1), (1, 1), (0, 0)))
    f32 = jnp.float32
    b3 = params["b3"].astype(f32)
    if has_aux:
        b3 = b3 + params["ba"].astype(f32)                 # fold aux bias
    wlist_named = {
        "w3": params["w3"].astype(mxu_dtype),              # (3,3,2C,C)
        "b3": b3.reshape(1, 1, C),
        "wg": params["wg"].astype(mxu_dtype),              # (2C,2C)
        "bg": params["bg"].astype(f32).reshape(1, 1, 2 * C),
    }
    if has_aux:
        wlist_named["wa"] = params["wa"].astype(mxu_dtype)  # (2Ca,C)

    in_specs = [pl.BlockSpec((1, H + 2, W + 2, C), lambda i: (i, 0, 0, 0))]
    inputs = [xpad]
    if has_aux:
        in_specs.append(pl.BlockSpec((1, H, W, Ca), lambda i: (i, 0, 0, 0)))
        inputs.append(aux)
        weights = [wlist_named["w3"], wlist_named["b3"], wlist_named["wa"],
                   wlist_named["wg"], wlist_named["bg"]]
    else:
        weights = [wlist_named["w3"], wlist_named["b3"],
                   wlist_named["wg"], wlist_named["bg"]]
    in_specs += [_full_spec(w) for w in weights]
    inputs += weights

    est = _plain_vmem_bytes(H, W, C, Ca, mxu_bytes)
    vmem_limit = int(min(max(2 * est, 32 * 2**20), 48 * 2**20))

    kernel = _make_plain_kernel(H, W, C, Ca, mxu_dtype, approx_recip)
    return pl.pallas_call(
        kernel,
        out_shape=jax.ShapeDtypeStruct((N, H, W, C), x.dtype),
        grid=(N,),
        in_specs=in_specs,
        out_specs=pl.BlockSpec((1, H, W, C), lambda i: (i, 0, 0, 0)),
        compiler_params=pltpu.CompilerParams(
            dimension_semantics=("parallel",),
            vmem_limit_bytes=vmem_limit),
    )(*inputs)


# ----------------------------------------------------------------------------
# Public entry point with the size guard
# ----------------------------------------------------------------------------
def gated_conv(x, params, aux=None, mxu_dtype=jnp.bfloat16):
    """Fused GatedConv forward. x: (N, H, W, C) float32 (NHWC)."""
    _, _, W, C = x.shape
    if W * C <= 128:
        # Lane-starved regime: fat-lane banded/block-diagonal formulation.
        return _gated_conv_fat(x, params, aux, mxu_dtype)
    # Channels already lane-dense: kron expansion would waste MXU & VMEM.
    return _gated_conv_plain(x, params, aux, mxu_dtype)


# ----------------------------------------------------------------------------
# Parameter construction (deterministic, weight-norm applied in glue)
# ----------------------------------------------------------------------------
def _wn_conv_weight(key, out_c, in_c, k):
    """Weight-normed conv weight (PyTorch weight_norm, dim=0), HWIO layout."""
    kv, kg = jax.random.split(key)
    v = jax.random.normal(kv, (out_c, in_c, k, k), jnp.float32) * 0.1
    g = 1.0 + 0.2 * jax.random.normal(kg, (out_c,), jnp.float32)
    norm = jnp.sqrt(jnp.sum(v * v, axis=(1, 2, 3)))
    w = v * (g / norm)[:, None, None, None]          # OIHW
    return jnp.transpose(w, (2, 3, 1, 0))            # HWIO


def init_params(key, num_channels, aux_channels=None):
    C = num_channels
    ks = jax.random.split(key, 6)
    params = {
        "w3": _wn_conv_weight(ks[0], C, 2 * C, 3),             # (3,3,2C,C)
        "b3": jax.random.normal(ks[1], (C,), jnp.float32) * 0.05,
        "wg": _wn_conv_weight(ks[2], 2 * C, 2 * C, 1)[0, 0],   # (2C,2C) in,out
        "bg": jax.random.normal(ks[3], (2 * C,), jnp.float32) * 0.05,
    }
    if aux_channels is not None:
        params["wa"] = _wn_conv_weight(ks[4], C, 2 * aux_channels, 1)[0, 0]
        params["ba"] = jax.random.normal(ks[5], (C,), jnp.float32) * 0.05
    return params


# ----------------------------------------------------------------------------
# Pure-JAX reference (mirrors the PyTorch module, in NHWC)
# ----------------------------------------------------------------------------
def _ref_concat_elu(x):
    return jax.nn.elu(jnp.concatenate([x, -x], axis=-1))


def ref_gated_conv(x, params, aux=None):
    hi = jax.lax.Precision.HIGHEST
    ce = _ref_concat_elu(x)
    h = jax.lax.conv_general_dilated(
        ce, params["w3"], (1, 1), "SAME",
        dimension_numbers=("NHWC", "HWIO", "NHWC"), precision=hi)
    h = h + params["b3"]
    if aux is not None:
        cea = _ref_concat_elu(aux)
        h = h + jnp.einsum("nhwc,cf->nhwf", cea, params["wa"], precision=hi)
        h = h + params["ba"]
    ce2 = _ref_concat_elu(h)
    y = jnp.einsum("nhwc,cf->nhwf", ce2, params["wg"], precision=hi)
    y = y + params["bg"]
    a, b = jnp.split(y, 2, axis=-1)
    return a * jax.nn.sigmoid(b)


# ----------------------------------------------------------------------------
if __name__ == "__main__":
    key = jax.random.PRNGKey(0)
    k_x, k_aux, k_p, k_x2, k_aux2, k_p2 = jax.random.split(key, 6)

    # ---- small-channel shape (exercises the fat-lane path) -----------------
    N, C, H, W = 2, 4, 16, 16     # num_channels=4
    CA = 3                        # aux_channels=3
    x_nchw = jax.random.normal(k_x, (N, C, H, W), jnp.float32)
    aux_nchw = jax.random.normal(k_aux, (N, CA, H, W), jnp.float32)
    params = init_params(k_p, C, CA)
    x = jnp.transpose(x_nchw, (0, 2, 3, 1))      # NHWC for the TPU kernel
    aux = jnp.transpose(aux_nchw, (0, 2, 3, 1))

    fwd_f32 = jax.jit(functools.partial(gated_conv, mxu_dtype=jnp.float32))
    fwd_bf16 = jax.jit(functools.partial(gated_conv, mxu_dtype=jnp.bfloat16))

    out_f32_aux = jax.block_until_ready(fwd_f32(x, params, aux))
    out_f32_noaux = jax.block_until_ready(fwd_f32(x, params))
    out_bf16_aux = jax.block_until_ready(fwd_bf16(x, params, aux))

    ref_aux = ref_gated_conv(x, params, aux)
    ref_noaux = ref_gated_conv(x, params, None)

    assert out_f32_aux.shape == (N, H, W, C)
    np.testing.assert_allclose(np.asarray(out_f32_aux), np.asarray(ref_aux),
                               rtol=1e-4, atol=1e-4)
    np.testing.assert_allclose(np.asarray(out_f32_noaux),
                               np.asarray(ref_noaux), rtol=1e-4, atol=1e-4)
    np.testing.assert_allclose(np.asarray(out_bf16_aux), np.asarray(ref_aux),
                               rtol=5e-2, atol=5e-2)

    # ---- larger-channel shape (exercises the plain-layout fallback) --------
    N2, C2, H2, W2, CA2 = 2, 32, 8, 8, 8          # W2*C2 = 256 > 128
    x2 = jax.random.normal(k_x2, (N2, H2, W2, C2), jnp.float32)
    aux2 = jax.random.normal(k_aux2, (N2, H2, W2, CA2), jnp.float32)
    params2 = init_params(k_p2, C2, CA2)
    out2 = jax.block_until_ready(fwd_f32(x2, params2, aux2))
    ref2 = ref_gated_conv(x2, params2, aux2)
    assert out2.shape == (N2, H2, W2, C2)
    np.testing.assert_allclose(np.asarray(out2), np.asarray(ref2),
                               rtol=1e-4, atol=1e-4)

    print("KERNEL_OK")
</pallas_src>

<mosaic_0001>
module attributes {stable_mosaic.version = 11 : i64} {
  func.func @kernel(%arg0: i32, %arg1: memref<2x18x72xf32, #tpu.memory_space<vmem>>, %arg2: memref<2x16x48xf32, #tpu.memory_space<vmem>>, %arg3: memref<3x144x64xf32, #tpu.memory_space<vmem>>, %arg4: memref<1x64xf32, #tpu.memory_space<vmem>>, %arg5: memref<96x64xf32, #tpu.memory_space<vmem>>, %arg6: memref<128x128xf32, #tpu.memory_space<vmem>>, %arg7: memref<1x128xf32, #tpu.memory_space<vmem>>, %arg8: memref<2x16x64xf32, #tpu.memory_space<vmem>>) attributes {dimension_semantics = [#tpu.dimension_semantics<parallel>], iteration_bounds = array<i64: 1>, scalar_prefetch = 0 : i64, scratch_operands = 0 : i64, tpu.core_type = #tpu.core_type<tc>, window_params = [{transform_indices = @transform_0, window_bounds = array<i64: 2, 18, 72>}, {transform_indices = @transform_1, window_bounds = array<i64: 2, 16, 48>}, {pipeline_mode = #tpu.pipeline_mode<synchronous>, transform_indices = @transform_2, window_bounds = array<i64: 3, 144, 64>}, {pipeline_mode = #tpu.pipeline_mode<synchronous>, transform_indices = @transform_3, window_bounds = array<i64: 1, 64>}, {pipeline_mode = #tpu.pipeline_mode<synchronous>, transform_indices = @transform_4, window_bounds = array<i64: 96, 64>}, {pipeline_mode = #tpu.pipeline_mode<synchronous>, transform_indices = @transform_5, window_bounds = array<i64: 128, 128>}, {pipeline_mode = #tpu.pipeline_mode<synchronous>, transform_indices = @transform_6, window_bounds = array<i64: 1, 128>}, {transform_indices = @transform_7, window_bounds = array<i64: 2, 16, 64>}]} {
    %c0 = arith.constant 0 : index
    %c0_0 = arith.constant 0 : index
    %c0_1 = arith.constant 0 : index
    %0 = vector.load %arg1[%c0, %c0_0, %c0_1] : memref<2x18x72xf32, #tpu.memory_space<vmem>>, vector<2x18x72xf32>
    %1 = math.absf %0 : vector<2x18x72xf32>
    %cst = arith.constant 0.000000e+00 : f32
    %2 = vector.broadcast %cst : f32 to vector<2x18x72xf32>
    %3 = arith.subf %2, %1 : vector<2x18x72xf32>
    %4 = math.exp %3 : vector<2x18x72xf32>
    %cst_2 = arith.constant 1.000000e+00 : f32
    %5 = vector.broadcast %cst_2 : f32 to vector<2x18x72xf32>
    %6 = arith.subf %4, %5 : vector<2x18x72xf32>
    %cst_3 = arith.constant 0.000000e+00 : f32
    %7 = vector.broadcast %cst_3 : f32 to vector<2x18x72xf32>
    %8 = arith.cmpf ogt, %0, %7 : vector<2x18x72xf32>
    %9 = arith.select %8, %0, %6 : vector<2x18x72xi1>, vector<2x18x72xf32>
    %cst_4 = arith.constant 0.000000e+00 : f32
    %10 = vector.broadcast %cst_4 : f32 to vector<2x18x72xf32>
    %11 = arith.subf %10, %0 : vector<2x18x72xf32>
    %12 = arith.select %8, %6, %11 : vector<2x18x72xi1>, vector<2x18x72xf32>
    %13 = tpu.concatenate %9, %12 in 2 : vector<2x18x72xf32>, vector<2x18x72xf32> -> vector<2x18x144xf32>
    %14 = vector.extract_strided_slice %13 {offsets = [0, 0, 0], sizes = [2, 16, 144], strides = [1, 1, 1]} : vector<2x18x144xf32> to vector<2x16x144xf32>
    %15 = vector.shape_cast %14 : vector<2x16x144xf32> to vector<32x144xf32>
    %c0_5 = arith.constant 0 : index
    %c0_6 = arith.constant 0 : index
    %c0_7 = arith.constant 0 : index
    %16 = vector.load %arg3[%c0_5, %c0_6, %c0_7] : memref<3x144x64xf32, #tpu.memory_space<vmem>>, vector<1x144x64xf32>
    %17 = vector.shape_cast %16 : vector<1x144x64xf32> to vector<144x64xf32>
    %cst_8 = arith.constant dense<0.000000e+00> : vector<32x64xf32>
    %18 = tpu.matmul %15, %17, %cst_8 {dimension_numbers = #tpu.dot_dimension_numbers<[1], [0], [0], [1], [0, 0, 1, 1], [], []>} : vector<32x144xf32>, vector<144x64xf32>, vector<32x64xf32> -> vector<32x64xf32>
    %19 = vector.extract_strided_slice %13 {offsets = [0, 1, 0], sizes = [2, 16, 144], strides = [1, 1, 1]} : vector<2x18x144xf32> to vector<2x16x144xf32>
    %20 = vector.shape_cast %19 : vector<2x16x144xf32> to vector<32x144xf32>
    %c1 = arith.constant 1 : index
    %c0_9 = arith.constant 0 : index
    %c0_10 = arith.constant 0 : index
    %21 = vector.load %arg3[%c1, %c0_9, %c0_10] : memref<3x144x64xf32, #tpu.memory_space<vmem>>, vector<1x144x64xf32>
    %22 = vector.shape_cast %21 : vector<1x144x64xf32> to vector<144x64xf32>
    %cst_11 = arith.constant dense<0.000000e+00> : vector<32x64xf32>
    %23 = tpu.matmul %20, %22, %cst_11 {dimension_numbers = #tpu.dot_dimension_numbers<[1], [0], [0], [1], [0, 0, 1, 1], [], []>} : vector<32x144xf32>, vector<144x64xf32>, vector<32x64xf32> -> vector<32x64xf32>
    %24 = arith.addf %18, %23 : vector<32x64xf32>
    %25 = vector.extract_strided_slice %13 {offsets = [0, 2, 0], sizes = [2, 16, 144], strides = [1, 1, 1]} : vector<2x18x144xf32> to vector<2x16x144xf32>
    %26 = vector.shape_cast %25 : vector<2x16x144xf32> to vector<32x144xf32>
    %c2 = arith.constant 2 : index
    %c0_12 = arith.constant 0 : index
    %c0_13 = arith.constant 0 : index
    %27 = vector.load %arg3[%c2, %c0_12, %c0_13] : memref<3x144x64xf32, #tpu.memory_space<vmem>>, vector<1x144x64xf32>
    %28 = vector.shape_cast %27 : vector<1x144x64xf32> to vector<144x64xf32>
    %cst_14 = arith.constant dense<0.000000e+00> : vector<32x64xf32>
    %29 = tpu.matmul %26, %28, %cst_14 {dimension_numbers = #tpu.dot_dimension_numbers<[1], [0], [0], [1], [0, 0, 1, 1], [], []>} : vector<32x144xf32>, vector<144x64xf32>, vector<32x64xf32> -> vector<32x64xf32>
    %30 = arith.addf %24, %29 : vector<32x64xf32>
    %c0_15 = arith.constant 0 : index
    %c0_16 = arith.constant 0 : index
    %31 = vector.load %arg4[%c0_15, %c0_16] : memref<1x64xf32, #tpu.memory_space<vmem>>, vector<1x64xf32>
    %32 = vector.broadcast %31 : vector<1x64xf32> to vector<32x64xf32>
    %33 = arith.addf %30, %32 : vector<32x64xf32>
    %c0_17 = arith.constant 0 : index
    %c0_18 = arith.constant 0 : index
    %c0_19 = arith.constant 0 : index
    %34 = vector.load %arg2[%c0_17, %c0_18, %c0_19] : memref<2x16x48xf32, #tpu.memory_space<vmem>>, vector<2x16x48xf32>
    %35 = math.absf %34 : vector<2x16x48xf32>
    %cst_20 = arith.constant 0.000000e+00 : f32
    %36 = vector.broadcast %cst_20 : f32 to vector<2x16x48xf32>
    %37 = arith.subf %36, %35 : vector<2x16x48xf32>
    %38 = math.exp %37 : vector<2x16x48xf32>
    %cst_21 = arith.constant 1.000000e+00 : f32
    %39 = vector.broadcast %cst_21 : f32 to vector<2x16x48xf32>
    %40 = arith.subf %38, %39 : vector<2x16x48xf32>
    %cst_22 = arith.constant 0.000000e+00 : f32
    %41 = vector.broadcast %cst_22 : f32 to vector<2x16x48xf32>
    %42 = arith.cmpf ogt, %34, %41 : vector<2x16x48xf32>
    %43 = arith.select %42, %34, %40 : vector<2x16x48xi1>, vector<2x16x48xf32>
    %cst_23 = arith.constant 0.000000e+00 : f32
    %44 = vector.broadcast %cst_23 : f32 to vector<2x16x48xf32>
    %45 = arith.subf %44, %34 : vector<2x16x48xf32>
    %46 = arith.select %42, %40, %45 : vector<2x16x48xi1>, vector<2x16x48xf32>
    %47 = tpu.concatenate %43, %46 in 2 : vector<2x16x48xf32>, vector<2x16x48xf32> -> vector<2x16x96xf32>
    %48 = vector.shape_cast %47 : vector<2x16x96xf32> to vector<32x96xf32>
    %c0_24 = arith.constant 0 : index
    %c0_25 = arith.constant 0 : index
    %49 = vector.load %arg5[%c0_24, %c0_25] : memref<96x64xf32, #tpu.memory_space<vmem>>, vector<96x64xf32>
    %cst_26 = arith.constant dense<0.000000e+00> : vector<32x64xf32>
    %50 = tpu.matmul %48, %49, %cst_26 {dimension_numbers = #tpu.dot_dimension_numbers<[1], [0], [0], [1], [0, 0, 1, 1], [], []>} : vector<32x96xf32>, vector<96x64xf32>, vector<32x64xf32> -> vector<32x64xf32>
    %51 = arith.addf %33, %50 : vector<32x64xf32>
    %52 = math.absf %51 : vector<32x64xf32>
    %cst_27 = arith.constant 0.000000e+00 : f32
    %53 = vector.broadcast %cst_27 : f32 to vector<32x64xf32>
    %54 = arith.subf %53, %52 : vector<32x64xf32>
    %55 = math.exp %54 : vector<32x64xf32>
    %cst_28 = arith.constant 1.000000e+00 : f32
    %56 = vector.broadcast %cst_28 : f32 to vector<32x64xf32>
    %57 = arith.subf %55, %56 : vector<32x64xf32>
    %cst_29 = arith.constant 0.000000e+00 : f32
    %58 = vector.broadcast %cst_29 : f32 to vector<32x64xf32>
    %59 = arith.cmpf ogt, %51, %58 : vector<32x64xf32>
    %60 = arith.select %59, %51, %57 : vector<32x64xi1>, vector<32x64xf32>
    %cst_30 = arith.constant 0.000000e+00 : f32
    %61 = vector.broadcast %cst_30 : f32 to vector<32x64xf32>
    %62 = arith.subf %61, %51 : vector<32x64xf32>
    %63 = arith.select %59, %57, %62 : vector<32x64xi1>, vector<32x64xf32>
    %64 = tpu.concatenate %60, %63 in 1 : vector<32x64xf32>, vector<32x64xf32> -> vector<32x128xf32>
    %c0_31 = arith.constant 0 : index
    %c0_32 = arith.constant 0 : index
    %65 = vector.load %arg6[%c0_31, %c0_32] : memref<128x128xf32, #tpu.memory_space<vmem>>, vector<128x128xf32>
    %cst_33 = arith.constant dense<0.000000e+00> : vector<32x128xf32>
    %66 = tpu.matmul %64, %65, %cst_33 {dimension_numbers = #tpu.dot_dimension_numbers<[1], [0], [0], [1], [0, 0, 1, 1], [], []>} : vector<32x128xf32>, vector<128x128xf32>, vector<32x128xf32> -> vector<32x128xf32>
    %c0_34 = arith.constant 0 : index
    %c0_35 = arith.constant 0 : index
    %67 = vector.load %arg7[%c0_34, %c0_35] : memref<1x128xf32, #tpu.memory_space<vmem>>, vector<1x128xf32>
    %68 = vector.broadcast %67 : vector<1x128xf32> to vector<32x128xf32>
    %69 = arith.addf %66, %68 : vector<32x128xf32>
    %70 = vector.extract_strided_slice %69 {offsets = [0, 0], sizes = [32, 64], strides = [1, 1]} : vector<32x128xf32> to vector<32x64xf32>
    %71 = vector.extract_strided_slice %69 {offsets = [0, 64], sizes = [32, 64], strides = [1, 1]} : vector<32x128xf32> to vector<32x64xf32>
    %cst_36 = arith.constant 0.000000e+00 : f32
    %72 = vector.broadcast %cst_36 : f32 to vector<32x64xf32>
    %73 = arith.subf %72, %71 : vector<32x64xf32>
    %74 = math.exp %73 : vector<32x64xf32>
    %cst_37 = arith.constant 1.000000e+00 : f32
    %75 = vector.broadcast %cst_37 : f32 to vector<32x64xf32>
    %76 = arith.addf %75, %74 : vector<32x64xf32>
    %77 = arith.divf %70, %76 : vector<32x64xf32>
    %78 = vector.shape_cast %77 : vector<32x64xf32> to vector<2x16x64xf32>
    %c0_38 = arith.constant 0 : index
    %c0_39 = arith.constant 0 : index
    %c0_40 = arith.constant 0 : index
    %79 = vector.load %arg8[%c0_38, %c0_39, %c0_40] : memref<2x16x64xf32, #tpu.memory_space<vmem>>, vector<2x16x64xf32>
    tpu.vector_store %arg8[%c0_38, %c0_39, %c0_40], %78 {strides = array<i32>} : memref<2x16x64xf32, #tpu.memory_space<vmem>>, vector<2x16x64xf32>,
    return
  }
  func.func @transform_0(%arg0: i32) -> (i32, i32, i32) {
    %c0_i32 = arith.constant 0 : i32
    %c0_i32_0 = arith.constant 0 : i32
    %c0_i32_1 = arith.constant 0 : i32
    return %arg0, %c0_i32, %c0_i32_0 : i32, i32, i32
  }
  func.func @transform_1(%arg0: i32) -> (i32, i32, i32) {
    %c0_i32 = arith.constant 0 : i32
    %c0_i32_0 = arith.constant 0 : i32
    %c0_i32_1 = arith.constant 0 : i32
    return %arg0, %c0_i32, %c0_i32_0 : i32, i32, i32
  }
  func.func @transform_2(%arg0: i32) -> (i32, i32, i32) {
    %c0_i32 = arith.constant 0 : i32
    %c0_i32_0 = arith.constant 0 : i32
    %c0_i32_1 = arith.constant 0 : i32
    %c0_i32_2 = arith.constant 0 : i32
    return %c0_i32, %c0_i32_0, %c0_i32_1 : i32, i32, i32
  }
  func.func @transform_3(%arg0: i32) -> (i32, i32) {
    %c0_i32 = arith.constant 0 : i32
    %c0_i32_0 = arith.constant 0 : i32
    %c0_i32_1 = arith.constant 0 : i32
    return %c0_i32, %c0_i32_0 : i32, i32
  }
  func.func @transform_4(%arg0: i32) -> (i32, i32) {
    %c0_i32 = arith.constant 0 : i32
    %c0_i32_0 = arith.constant 0 : i32
    %c0_i32_1 = arith.constant 0 : i32
    return %c0_i32, %c0_i32_0 : i32, i32
  }
  func.func @transform_5(%arg0: i32) -> (i32, i32) {
    %c0_i32 = arith.constant 0 : i32
    %c0_i32_0 = arith.constant 0 : i32
    %c0_i32_1 = arith.constant 0 : i32
    return %c0_i32, %c0_i32_0 : i32, i32
  }
  func.func @transform_6(%arg0: i32) -> (i32, i32) {
    %c0_i32 = arith.constant 0 : i32
    %c0_i32_0 = arith.constant 0 : i32
    %c0_i32_1 = arith.constant 0 : i32
    return %c0_i32, %c0_i32_0 : i32, i32
  }
  func.func @transform_7(%arg0: i32) -> (i32, i32, i32) {
    %c0_i32 = arith.constant 0 : i32
    %c0_i32_0 = arith.constant 0 : i32
    %c0_i32_1 = arith.constant 0 : i32
    return %arg0, %c0_i32, %c0_i32_0 : i32, i32, i32
  }
}

</mosaic_0001>

<llo_original>
// kernel: tile.33
$region0: #{tile.33}
  #allocation0 [shape = 's32[1]{0}', space=sflag, size = 0x4, scoped, tag = 'scoped memory for tile.33']
  %s0 = inlined_call_operand.vmem [shape: f32[4], index: 0, kind: input, shape index: {}]
  %s1 = inlined_call_operand.vmem [shape: f32[16,4], index: 1, kind: output, shape index: {}]
  // Predicated region
  $region2: #{tile.33} parent=0 // pred_check
    _
  $region3: #{tile.33} parent=0 // pred_check_branch
    %3 = sbr.rel (0) target = $region5
  $region4: #{tile.33} parent=0 // pred_region
    _
  $region5: #{tile.33} parent=0 // pred_fallthru
    _
  %v4 = vld [vmem:[%s0] ss:$0 sm:$0xff]
  %5 = vst [vmem:[%s1] sm:$0xff] %v4
  %s6 = scalar_lea.vmem %s1, 8
  %7 = vst [vmem:[%s6] sm:$0xff] %v4

// kernel: tile.34
$region0: #{tile.34}
  %s0 = inlined_call_operand.vmem [shape: f32[16,4], index: 0, kind: input, shape index: {}]
  %s1 = inlined_call_operand.vmem [shape: f32[64], index: 1, kind: output, shape index: {}]
  $region1: #{tile.34} parent=0
    #allocation0 [shape = 'u8[4096]{0}', space=vmem, size = 0x1000, scoped, tag = 'scoped mem for output reshape']
    %v2 = vld [vmem:[%s0] sm:$0x1]
    %vm3 = vcmask 31744
    %4 = vst.msk [vmem:[#allocation0] sm:$0x1] %vm3, %v2
    %s5 = scalar_lea.vmem %s0, 15
    %v6 = vld [vmem:[%s5] sm:$0x1]
    %7 = vrot.lane.b32.xlu0 %v6, 60
    %v8 = vpop.permute.xlu0 %7
    %vm9 = vcmask 523744
    %10 = vst.msk [vmem:[#allocation0] sm:$0x1] %vm9, %v8
    %s11 = scalar_lea.vmem %s0, 14
    %v12 = vld [vmem:[%s11] sm:$0x1]
    %13 = vrot.lane.b32.xlu0 %v12, 56
    %v14 = vpop.permute.xlu0 %13
    %vm15 = vcmask 490944
    %16 = vst.msk [vmem:[#allocation0] sm:$0x1] %vm15, %v14
    %s17 = scalar_lea.vmem %s0, 13
    %v18 = vld [vmem:[%s17] sm:$0x1]
    %19 = vrot.lane.b32.xlu0 %v18, 52
    %v20 = vpop.permute.xlu0 %19
    %vm21 = vcmask 458144
    %22 = vst.msk [vmem:[#allocation0] sm:$0x1] %vm21, %v20
    %s23 = scalar_lea.vmem %s0, 12
    %v24 = vld [vmem:[%s23] sm:$0x1]
    %25 = vrot.lane.b32.xlu0 %v24, 48
    %v26 = vpop.permute.xlu0 %25
    %vm27 = vcmask 425344
    %28 = vst.msk [vmem:[#allocation0] sm:$0x1] %vm27, %v26
    %s29 = scalar_lea.vmem %s0, 11
    %v30 = vld [vmem:[%s29] sm:$0x1]
    %31 = vrot.lane.b32.xlu0 %v30, 44
    %v32 = vpop.permute.xlu0 %31
    %vm33 = vcmask 392544
    %34 = vst.msk [vmem:[#allocation0] sm:$0x1] %vm33, %v32
    %s35 = scalar_lea.vmem %s0, 10
    %v36 = vld [vmem:[%s35] sm:$0x1]
    %37 = vrot.lane.b32.xlu0 %v36, 40
    %v38 = vpop.permute.xlu0 %37
    %vm39 = vcmask 359744
    %40 = vst.msk [vmem:[#allocation0] sm:$0x1] %vm39, %v38
    %s41 = scalar_lea.vmem %s0, 9
    %v42 = vld [vmem:[%s41] sm:$0x1]
    %43 = vrot.lane.b32.xlu0 %v42, 36
    %v44 = vpop.permute.xlu0 %43
    %vm45 = vcmask 326944
    %46 = vst.msk [vmem:[#allocation0] sm:$0x1] %vm45, %v44
    %s47 = scalar_lea.vmem %s0, 8
    %v48 = vld [vmem:[%s47] sm:$0x1]
    %49 = vrot.lane.b32.xlu0 %v48, 32
    %v50 = vpop.permute.xlu0 %49
    %vm51 = vcmask 294144
    %52 = vst.msk [vmem:[#allocation0] sm:$0x1] %vm51, %v50
    %s53 = scalar_lea.vmem %s0, 7
    %v54 = vld [vmem:[%s53] sm:$0x1]
    %55 = vrot.lane.b32.xlu0 %v54, 28
    %v56 = vpop.permute.xlu0 %55
    %vm57 = vcmask 261344
    %58 = vst.msk [vmem:[#allocation0] sm:$0x1] %vm57, %v56
    %s59 = scalar_lea.vmem %s0, 6
    %v60 = vld [vmem:[%s59] sm:$0x1]
    %61 = vrot.lane.b32.xlu0 %v60, 24
    %v62 = vpop.permute.xlu0 %61
    %vm63 = vcmask 228544
    %64 = vst.msk [vmem:[#allocation0] sm:$0x1] %vm63, %v62
    %s65 = scalar_lea.vmem %s0, 5
    %v66 = vld [vmem:[%s65] sm:$0x1]
    %67 = vrot.lane.b32.xlu0 %v66, 20
    %v68 = vpop.permute.xlu0 %67
    %vm69 = vcmask 195744
    %70 = vst.msk [vmem:[#allocation0] sm:$0x1] %vm69, %v68
    %s71 = scalar_lea.vmem %s0, 4
    %v72 = vld [vmem:[%s71] sm:$0x1]
    %73 = vrot.lane.b32.xlu0 %v72, 16
    %v74 = vpop.permute.xlu0 %73
    %vm75 = vcmask 162944
    %76 = vst.msk [vmem:[#allocation0] sm:$0x1] %vm75, %v74
    %s77 = scalar_lea.vmem %s0, 3
    %v78 = vld [vmem:[%s77] sm:$0x1]
    %79 = vrot.lane.b32.xlu0 %v78, 12
    %v80 = vpop.permute.xlu0 %79
    %vm81 = vcmask 130144
    %82 = vst.msk [vmem:[#allocation0] sm:$0x1] %vm81, %v80
    %s83 = scalar_lea.vmem %s0, 2
    %v84 = vld [vmem:[%s83] sm:$0x1]
    %85 = vrot.lane.b32.xlu0 %v84, 8
    %v86 = vpop.permute.xlu0 %85
    %vm87 = vcmask 97344
    %88 = vst.msk [vmem:[#allocation0] sm:$0x1] %vm87, %v86
    %s89 = scalar_lea.vmem %s0, 1
    %v90 = vld [vmem:[%s89] sm:$0x1]
    %91 = vrot.lane.b32.xlu0 %v90, 4
    %v92 = vpop.permute.xlu0 %91
    %vm93 = vcmask 64544
    %94 = vst.msk [vmem:[#allocation0] sm:$0x1] %vm93, %v92
    %s96 = sshllo.u32 0, 1
    %v98 = vld [vmem:[#allocation0] sm:%s96]
    %s99 = sshllo.u32 0, 1
    %100 = vst [vmem:[%s1] sm:%s99] %v98

// kernel: gated_conv.1
$region0: #{gated_conv.1}
  #allocation0 [shape = 'u32[]', space=smem, size = 0x4, offset = 0x4, fixed_abs, tag = 'smem constant byte address 0x4 - core index']
  #allocation1 [shape = 'u32[144,128]{1,0:T(1,128)}', space=vmem, size = 0x12000, scoped, tag = 'internal scratch']
  %s0 = inlined_call_operand.vmem [shape: f32[2,18,72], index: 0, kind: input, shape index: {}]
  %s1 = inlined_call_operand.vmem [shape: f32[2,16,48], index: 1, kind: input, shape index: {}]
  %s2 = inlined_call_operand.vmem [shape: f32[3,144,64], index: 2, kind: input, shape index: {}]
  %s3 = inlined_call_operand.vmem [shape: f32[1,64], index: 3, kind: input, shape index: {}]
  %s4 = inlined_call_operand.vmem [shape: f32[96,64], index: 4, kind: input, shape index: {}]
  %s5 = inlined_call_operand.vmem [shape: f32[128,128], index: 5, kind: input, shape index: {}]
  %s6 = inlined_call_operand.vmem [shape: f32[1,128], index: 6, kind: input, shape index: {}]
  %s7 = inlined_call_operand.vmem [shape: f32[2,16,64], index: 7, kind: output, shape index: {}]
  %s8 = sld [smem:[#allocation0]]
  $region38: #{gated_conv.1} parent=0
    _
  %s10 = ssub.s32 1, %s8
  %s11 = scalar_select 0, %s10, %s8
  // Predicated region
  $region2: #{gated_conv.1} parent=0 // pred_check
    _
  $region3: #{gated_conv.1} parent=0 // pred_check_branch
    %13 = sbr.rel (0) target = $region5
  $region4: #{gated_conv.1} parent=0 // pred_region
    _
  $region5: #{gated_conv.1} parent=0 // pred_fallthru
    _
  // Predicated region
  $region6: #{gated_conv.1} parent=0 // pred_check
    _
  $region7: #{gated_conv.1} parent=0 // pred_check_branch
    %15 = sbr.rel (0) target = $region9
  $region8: #{gated_conv.1} parent=0 // pred_region
    _
  $region9: #{gated_conv.1} parent=0 // pred_fallthru
    _
  // Predicated region
  $region10: #{gated_conv.1} parent=0 // pred_check
    _
  $region11: #{gated_conv.1} parent=0 // pred_check_branch
    %17 = sbr.rel (0) target = $region13
  $region12: #{gated_conv.1} parent=0 // pred_region
    _
  $region13: #{gated_conv.1} parent=0 // pred_fallthru
    _
  // Predicated region
  $region14: #{gated_conv.1} parent=0 // pred_check
    _
  $region15: #{gated_conv.1} parent=0 // pred_check_branch
    %19 = sbr.rel (0) target = $region17
  $region16: #{gated_conv.1} parent=0 // pred_region
    _
  $region17: #{gated_conv.1} parent=0 // pred_fallthru
    _
  // Predicated region
  $region18: #{gated_conv.1} parent=0 // pred_check
    _
  $region19: #{gated_conv.1} parent=0 // pred_check_branch
    %21 = sbr.rel (0) target = $region21
  $region20: #{gated_conv.1} parent=0 // pred_region
    _
  $region21: #{gated_conv.1} parent=0 // pred_fallthru
    _
  // Predicated region
  $region22: #{gated_conv.1} parent=0 // pred_check
    _
  $region23: #{gated_conv.1} parent=0 // pred_check_branch
    %23 = sbr.rel (0) target = $region25
  $region24: #{gated_conv.1} parent=0 // pred_region
    _
  $region25: #{gated_conv.1} parent=0 // pred_fallthru
    _
  // Predicated region
  $region26: #{gated_conv.1} parent=0 // pred_check
    _
  $region27: #{gated_conv.1} parent=0 // pred_check_branch
    %25 = sbr.rel (0) target = $region29
  $region28: #{gated_conv.1} parent=0 // pred_region
    _
  $region29: #{gated_conv.1} parent=0 // pred_fallthru
    _
  %v26 = vld [vmem:[%s0] sm:$0xff]
  %v27 = vld [vmem:[%s0 + $0x8] sm:$0xff]
  %v28 = vld [vmem:[%s0 + $0x10] sm:$0x3]
  %v29 = vld [vmem:[%s0 + $0x18] sm:$0xff]
  %v30 = vld [vmem:[%s0 + $0x20] sm:$0xff]
  %v31 = vld [vmem:[%s0 + $0x28] sm:$0x3]
  %v32 = vand.u32 2147483647, %v26
  %v33 = vand.u32 2147483647, %v27
  %v34 = vand.u32 2147483647, %v28
  %v35 = vand.u32 2147483647, %v29
  %v36 = vand.u32 2147483647, %v30
  %v37 = vand.u32 2147483647, %v31
  %v38 = vsub.f32 0.0, %v32
  %v39 = vsub.f32 0.0, %v33
  %v40 = vsub.f32 0.0, %v34
  %v41 = vsub.f32 0.0, %v35
  %v42 = vsub.f32 0.0, %v36
  %v43 = vsub.f32 0.0, %v37
  %v44 = vmul.f32 %v38, 1.442695
  %v45 = vpow.pop %v44
  %v46 = vmul.f32 %v39, 1.442695
  %v47 = vpow.pop %v46
  %v48 = vmul.f32 %v40, 1.442695
  %v49 = vpow.pop %v48
  %v50 = vmul.f32 %v41, 1.442695
  %v51 = vpow.pop %v50
  %v52 = vmul.f32 %v42, 1.442695
  %v53 = vpow.pop %v52
  %v54 = vmul.f32 %v43, 1.442695
  %v55 = vpow.pop %v54
  %v56 = vsub.f32 %v45, 1.0
  %v57 = vsub.f32 %v47, 1.0
  %v58 = vsub.f32 %v49, 1.0
  %v59 = vsub.f32 %v51, 1.0
  %v60 = vsub.f32 %v53, 1.0
  %v61 = vsub.f32 %v55, 1.0
  %vm62 = vcmp.gt.f32.partialorder %v26, 0.0
  %vm63 = vcmp.gt.f32.partialorder %v27, 0.0
  %vm64 = vcmp.gt.f32.partialorder %v28, 0.0
  %vm65 = vcmp.gt.f32.partialorder %v29, 0.0
  %vm66 = vcmp.gt.f32.partialorder %v30, 0.0
  %vm67 = vcmp.gt.f32.partialorder %v31, 0.0
  %v68 = vsel %vm62, %v26, %v56
  %v69 = vsel %vm63, %v27, %v57
  %v70 = vsel %vm64, %v28, %v58
  %v71 = vsel %vm65, %v29, %v59
  %v72 = vsel %vm66, %v30, %v60
  %v73 = vsel %vm67, %v31, %v61
  %v74 = vsub.f32 0.0, %v26
  %v75 = vsub.f32 0.0, %v27
  %v76 = vsub.f32 0.0, %v28
  %v77 = vsub.f32 0.0, %v29
  %v78 = vsub.f32 0.0, %v30
  %v79 = vsub.f32 0.0, %v31
  %v80 = vsel %vm62, %v56, %v74
  %v81 = vsel %vm63, %v57, %v75
  %v82 = vsel %vm64, %v58, %v76
  %v83 = vsel %vm65, %v59, %v77
  %v84 = vsel %vm66, %v60, %v78
  %v85 = vsel %vm67, %v61, %v79
  %92 = vrot.lane.b32.xlu0 %v80, 72
  %v93 = vpop.permute.xlu0 %92
  %94 = vrot.lane.b32.xlu0 %v81, 72
  %v95 = vpop.permute.xlu0 %94
  %96 = vrot.lane.b32.xlu0 %v82, 72
  %v97 = vpop.permute.xlu0 %96
  %98 = vrot.lane.b32.xlu0 %v83, 72
  %v99 = vpop.permute.xlu0 %98
  %100 = vrot.lane.b32.xlu0 %v84, 72
  %v101 = vpop.permute.xlu0 %100
  %102 = vrot.lane.b32.xlu0 %v85, 72
  %v103 = vpop.permute.xlu0 %102
  %vm110 = vcmask 588800
  %v111 = vsel %vm110, %v68, %v93
  %v112 = vsel %vm110, %v69, %v95
  %v113 = vsel %vm110, %v70, %v97
  %v114 = vsel %vm110, %v71, %v99
  %v115 = vsel %vm110, %v72, %v101
  %v116 = vsel %vm110, %v73, %v103
  %v117 = vld [vmem:[%s2] sm:$0xff]
  %v118 = vld [vmem:[%s2 + $0x8] sm:$0xff]
  %v119 = vld [vmem:[%s2 + $0x10] sm:$0xff]
  %v120 = vld [vmem:[%s2 + $0x18] sm:$0xff]
  %v121 = vld [vmem:[%s2 + $0x20] sm:$0xff]
  %v122 = vld [vmem:[%s2 + $0x28] sm:$0xff]
  %v123 = vld [vmem:[%s2 + $0x30] sm:$0xff]
  %v124 = vld [vmem:[%s2 + $0x38] sm:$0xff]
  %v125 = vld [vmem:[%s2 + $0x40] sm:$0xff]
  %v126 = vld [vmem:[%s2 + $0x48] sm:$0xff]
  %v127 = vld [vmem:[%s2 + $0x50] sm:$0xff]
  %v128 = vld [vmem:[%s2 + $0x58] sm:$0xff]
  %v129 = vld [vmem:[%s2 + $0x60] sm:$0xff]
  %v130 = vld [vmem:[%s2 + $0x68] sm:$0xff]
  %v131 = vld [vmem:[%s2 + $0x70] sm:$0xff]
  %v132 = vld [vmem:[%s2 + $0x78] sm:$0xff]
  %v133 = vld [vmem:[%s2 + $0x80] sm:$0xff]
  %v134 = vld [vmem:[%s2 + $0x88] sm:$0xff]
  %vm141 = vcmask 1046528
  %v142 = vrot.slane %v111, 1
  %v143 = vrot.slane %v112, 1
  %v144 = vsel %vm141, %v142, %v143
  %v145 = vrot.slane %v93, 1
  %v146 = vrot.slane %v95, 1
  %v147 = vsel %vm141, %v145, %v146
  %v148 = vrot.slane %v113, 1
  %v149 = vsel %vm141, %v143, %v148
  %v150 = vrot.slane %v97, 1
  %v151 = vsel %vm141, %v146, %v150
  %v152 = vrot.slane %v114, 1
  %v153 = vrot.slane %v115, 1
  %v154 = vsel %vm141, %v152, %v153
  %v155 = vrot.slane %v99, 1
  %v156 = vrot.slane %v101, 1
  %v157 = vsel %vm141, %v155, %v156
  %v158 = vrot.slane %v116, 1
  %v159 = vsel %vm141, %v153, %v158
  %v160 = vrot.slane %v103, 1
  %v161 = vsel %vm141, %v156, %v160
  %s166 = scalar_lea.vmem %s2, 144
  %v167 = vld [vmem:[%s166] sm:$0xff]
  %v168 = vld [vmem:[%s166 + $0x8] sm:$0xff]
  %v169 = vld [vmem:[%s166 + $0x10] sm:$0xff]
  %v170 = vld [vmem:[%s166 + $0x18] sm:$0xff]
  %v171 = vld [vmem:[%s166 + $0x20] sm:$0xff]
  %v172 = vld [vmem:[%s166 + $0x28] sm:$0xff]
  %v173 = vld [vmem:[%s166 + $0x30] sm:$0xff]
  %v174 = vld [vmem:[%s166 + $0x38] sm:$0xff]
  %v175 = vld [vmem:[%s166 + $0x40] sm:$0xff]
  %v176 = vld [vmem:[%s166 + $0x48] sm:$0xff]
  %v177 = vld [vmem:[%s166 + $0x50] sm:$0xff]
  %v178 = vld [vmem:[%s166 + $0x58] sm:$0xff]
  %v179 = vld [vmem:[%s166 + $0x60] sm:$0xff]
  %v180 = vld [vmem:[%s166 + $0x68] sm:$0xff]
  %v181 = vld [vmem:[%s166 + $0x70] sm:$0xff]
  %v182 = vld [vmem:[%s166 + $0x78] sm:$0xff]
  %v183 = vld [vmem:[%s166 + $0x80] sm:$0xff]
  %v184 = vld [vmem:[%s166 + $0x88] sm:$0xff]
  %vm185 = vcmask 130048
  %v186 = vsel %vm185, %v147, 0
  %v188 = vsel %vm185, %v151, 0
  %v190 = vsel %vm185, %v157, 0
  %v192 = vsel %vm185, %v161, 0
  %194 = vmatprep.subr.mxu0 0.0
  %195 = vmatpush1.msra.mxu0 %v167
  %196 = vmatprep.subr.mxu0 0.0
  %197 = vmatpush1.msra.mxu0 %v168
  %198 = vmatprep.subr.mxu0 0.0
  %199 = vmatpush1.msra.mxu0 %v169
  %200 = vmatprep.subr.mxu0 0.0
  %201 = vmatpush1.msra.mxu0 %v170
  %202 = vmatprep.subr.mxu0 0.0
  %203 = vmatpush1.msra.mxu0 %v171
  %204 = vmatprep.subr.mxu0 0.0
  %205 = vmatpush1.msra.mxu0 %v172
  %206 = vmatprep.subr.mxu0 0.0
  %207 = vmatpush1.msra.mxu0 %v173
  %208 = vmatprep.subr.mxu0 0.0
  %209 = vmatpush1.msra.mxu0 %v174
  %210 = vmatprep.subr.mxu0 0.0
  %211 = vmatpush1.msra.mxu0 %v175
  %212 = vmatprep.subr.mxu0 0.0
  %213 = vmatpush1.msra.mxu0 %v176
  %214 = vmatprep.subr.mxu0 0.0
  %215 = vmatpush1.msra.mxu0 %v177
  %216 = vmatprep.subr.mxu0 0.0
  %217 = vmatpush1.msra.mxu0 %v178
  %218 = vmatprep.subr.mxu0 0.0
  %219 = vmatpush1.msra.mxu0 %v179
  %220 = vmatprep.subr.mxu0 0.0
  %221 = vmatpush1.msra.mxu0 %v180
  %222 = vmatprep.subr.mxu0 0.0
  %223 = vmatpush1.msra.mxu0 %v181
  %224 = vmatprep.subr.mxu0 0.0
  %225 = vmatpush1.msra.mxu0 %v182
  %226 = vmatprep.subr.mxu0 0.0
  %227 = vmatpush1.msra.mxu0 %v183
  %228 = vmatprep.subr.mxu0 0.0
  %229 = vmatpush1.msra.mxu0 %v184
  %230 = vmatprep.subr.mxu0 0.0
  %231 = vmatpush1.msra.mxu0 0.0
  %232 = vmatprep.subr.mxu0 0.0
  %233 = vmatpush1.msra.mxu0 0.0
  %234 = vmatprep.subr.mxu0 0.0
  %235 = vmatpush1.msra.mxu0 0.0
  %236 = vmatprep.subr.mxu0 0.0
  %237 = vmatpush1.msra.mxu0 0.0
  %238 = vmatprep.subr.mxu0 0.0
  %239 = vmatpush1.msra.mxu0 0.0
  %240 = vmatprep.subr.mxu0 0.0
  %241 = vmatpush1.msra.mxu0 0.0
  %242 = vmatprep.subr.mxu0 0.0
  %243 = vmatpush1.msra.mxu0 0.0
  %244 = vmatprep.subr.mxu0 0.0
  %245 = vmatpush1.msra.mxu0 0.0
  %246 = vmatprep.subr.mxu0 0.0
  %247 = vmatpush1.msra.mxu0 0.0
  %248 = vmatprep.subr.mxu0 0.0
  %249 = vmatpush1.msra.mxu0 0.0
  %250 = vmatprep.subr.mxu0 0.0
  %251 = vmatpush1.msra.mxu0 0.0
  %252 = vmatprep.subr.mxu0 0.0
  %253 = vmatpush1.msra.mxu0 0.0
  %254 = vmatprep.subr.mxu0 0.0
  %255 = vmatpush1.msra.mxu0 0.0
  %256 = vmatprep.subr.mxu0 0.0
  %257 = vmatpush1.msra.mxu0 0.0
  %258 = vmatprep.mubr.f32.mxu0 %v186
  %259 = vmatmul.mubr.f32.gmra.mrb[0].mxu0 %v144
  %v260 = vpop.f32.mrb[0].mxu0
  %v261 = vadd.f32 0.0, %v260
  %v262 = vpop.f32.mrb[0].mxu0
  %263 = vmatprep.mubr.f32.mxu0 %v188
  %264 = vmatmul.mubr.f32.gmra.mrb[0].mxu0 %v149
  %v265 = vpop.f32.mrb[0].mxu0
  %v266 = vadd.f32 0.0, %v265
  %v267 = vpop.f32.mrb[0].mxu0
  %268 = vmatprep.mubr.f32.mxu0 %v190
  %269 = vmatmul.mubr.f32.gmra.mrb[0].mxu0 %v154
  %v270 = vpop.f32.mrb[0].mxu0
  %v271 = vadd.f32 0.0, %v270
  %v272 = vpop.f32.mrb[0].mxu0
  %273 = vmatprep.mubr.f32.mxu0 %v192
  %274 = vmatmul.mubr.f32.gmra.mrb[0].mxu0 %v159
  %v275 = vpop.f32.mrb[0].mxu0
  %v276 = vadd.f32 0.0, %v275
  %v277 = vpop.f32.mrb[0].mxu0
  %278 = vdwg.mxu0
  %v279 = vsel %vm185, %v93, 0
  %v281 = vsel %vm185, %v95, 0
  %v283 = vsel %vm185, %v99, 0
  %v285 = vsel %vm185, %v101, 0
  %287 = vmatprep.subr.mxu0 0.0
  %288 = vmatpush1.msra.mxu0 %v117
  %289 = vmatprep.subr.mxu0 0.0
  %290 = vmatpush1.msra.mxu0 %v118
  %291 = vmatprep.subr.mxu0 0.0
  %292 = vmatpush1.msra.mxu0 %v119
  %293 = vmatprep.subr.mxu0 0.0
  %294 = vmatpush1.msra.mxu0 %v120
  %295 = vmatprep.subr.mxu0 0.0
  %296 = vmatpush1.msra.mxu0 %v121
  %297 = vmatprep.subr.mxu0 0.0
  %298 = vmatpush1.msra.mxu0 %v122
  %299 = vmatprep.subr.mxu0 0.0
  %300 = vmatpush1.msra.mxu0 %v123
  %301 = vmatprep.subr.mxu0 0.0
  %302 = vmatpush1.msra.mxu0 %v124
  %303 = vmatprep.subr.mxu0 0.0
  %304 = vmatpush1.msra.mxu0 %v125
  %305 = vmatprep.subr.mxu0 0.0
  %306 = vmatpush1.msra.mxu0 %v126
  %307 = vmatprep.subr.mxu0 0.0
  %308 = vmatpush1.msra.mxu0 %v127
  %309 = vmatprep.subr.mxu0 0.0
  %310 = vmatpush1.msra.mxu0 %v128
  %311 = vmatprep.subr.mxu0 0.0
  %312 = vmatpush1.msra.mxu0 %v129
  %313 = vmatprep.subr.mxu0 0.0
  %314 = vmatpush1.msra.mxu0 %v130
  %315 = vmatprep.subr.mxu0 0.0
  %316 = vmatpush1.msra.mxu0 %v131
  %317 = vmatprep.subr.mxu0 0.0
  %318 = vmatpush1.msra.mxu0 %v132
  %319 = vmatprep.subr.mxu0 0.0
  %320 = vmatpush1.msra.mxu0 %v133
  %321 = vmatprep.subr.mxu0 0.0
  %322 = vmatpush1.msra.mxu0 %v134
  %323 = vmatprep.subr.mxu0 0.0
  %324 = vmatpush1.msra.mxu0 0.0
  %325 = vmatprep.subr.mxu0 0.0
  %326 = vmatpush1.msra.mxu0 0.0
  %327 = vmatprep.subr.mxu0 0.0
  %328 = vmatpush1.msra.mxu0 0.0
  %329 = vmatprep.subr.mxu0 0.0
  %330 = vmatpush1.msra.mxu0 0.0
  %331 = vmatprep.subr.mxu0 0.0
  %332 = vmatpush1.msra.mxu0 0.0
  %333 = vmatprep.subr.mxu0 0.0
  %334 = vmatpush1.msra.mxu0 0.0
  %335 = vmatprep.subr.mxu0 0.0
  %336 = vmatpush1.msra.mxu0 0.0
  %337 = vmatprep.subr.mxu0 0.0
  %338 = vmatpush1.msra.mxu0 0.0
  %339 = vmatprep.subr.mxu0 0.0
  %340 = vmatpush1.msra.mxu0 0.0
  %341 = vmatprep.subr.mxu0 0.0
  %342 = vmatpush1.msra.mxu0 0.0
  %343 = vmatprep.subr.mxu0 0.0
  %344 = vmatpush1.msra.mxu0 0.0
  %345 = vmatprep.subr.mxu0 0.0
  %346 = vmatpush1.msra.mxu0 0.0
  %347 = vmatprep.subr.mxu0 0.0
  %348 = vmatpush1.msra.mxu0 0.0
  %349 = vmatprep.subr.mxu0 0.0
  %350 = vmatpush1.msra.mxu0 0.0
  %351 = vmatprep.mubr.f32.mxu0 %v279
  %352 = vmatmul.mubr.f32.gmra.mrb[0].mxu0 %v111
  %v353 = vpop.f32.mrb[0].mxu0
  %v354 = vadd.f32 %v261, %v353
  %v355 = vpop.f32.mrb[0].mxu0
  %356 = vmatprep.mubr.f32.mxu0 %v281
  %357 = vmatmul.mubr.f32.gmra.mrb[0].mxu0 %v112
  %v358 = vpop.f32.mrb[0].mxu0
  %v359 = vadd.f32 %v266, %v358
  %v360 = vpop.f32.mrb[0].mxu0
  %361 = vmatprep.mubr.f32.mxu0 %v283
  %362 = vmatmul.mubr.f32.gmra.mrb[0].mxu0 %v114
  %v363 = vpop.f32.mrb[0].mxu0
  %v364 = vadd.f32 %v271, %v363
  %v365 = vpop.f32.mrb[0].mxu0
  %366 = vmatprep.mubr.f32.mxu0 %v285
  %367 = vmatmul.mubr.f32.gmra.mrb[0].mxu0 %v115
  %v368 = vpop.f32.mrb[0].mxu0
  %v369 = vadd.f32 %v276, %v368
  %v370 = vpop.f32.mrb[0].mxu0
  %371 = vdwg.mxu0
  %vm372 = vcmask 1045504
  %v373 = vrot.slane %v111, 2
  %v374 = vrot.slane %v112, 2
  %v375 = vsel %vm372, %v373, %v374
  %v376 = vrot.slane %v93, 2
  %v377 = vrot.slane %v95, 2
  %v378 = vsel %vm372, %v376, %v377
  %v379 = vrot.slane %v113, 2
  %v380 = vsel %vm372, %v374, %v379
  %v381 = vrot.slane %v97, 2
  %v382 = vsel %vm372, %v377, %v381
  %v383 = vrot.slane %v114, 2
  %v384 = vrot.slane %v115, 2
  %v385 = vsel %vm372, %v383, %v384
  %v386 = vrot.slane %v99, 2
  %v387 = vrot.slane %v101, 2
  %v388 = vsel %vm372, %v386, %v387
  %v389 = vrot.slane %v116, 2
  %v390 = vsel %vm372, %v384, %v389
  %v391 = vrot.slane %v103, 2
  %v392 = vsel %vm372, %v387, %v391
  %s397 = scalar_lea.vmem %s2, 288
  %v398 = vld [vmem:[%s397] sm:$0xff]
  %v399 = vld [vmem:[%s397 + $0x8] sm:$0xff]
  %v400 = vld [vmem:[%s397 + $0x10] sm:$0xff]
  %v401 = vld [vmem:[%s397 + $0x18] sm:$0xff]
  %v402 = vld [vmem:[%s397 + $0x20] sm:$0xff]
  %v403 = vld [vmem:[%s397 + $0x28] sm:$0xff]
  %v404 = vld [vmem:[%s397 + $0x30] sm:$0xff]
  %v405 = vld [vmem:[%s397 + $0x38] sm:$0xff]
  %v406 = vld [vmem:[%s397 + $0x40] sm:$0xff]
  %v407 = vld [vmem:[%s397 + $0x48] sm:$0xff]
  %v408 = vld [vmem:[%s397 + $0x50] sm:$0xff]
  %v409 = vld [vmem:[%s397 + $0x58] sm:$0xff]
  %v410 = vld [vmem:[%s397 + $0x60] sm:$0xff]
  %v411 = vld [vmem:[%s397 + $0x68] sm:$0xff]
  %v412 = vld [vmem:[%s397 + $0x70] sm:$0xff]
  %v413 = vld [vmem:[%s397 + $0x78] sm:$0xff]
  %v414 = vld [vmem:[%s397 + $0x80] sm:$0xff]
  %v415 = vld [vmem:[%s397 + $0x88] sm:$0xff]
  %v416 = vsel %vm185, %v378, 0
  %v418 = vsel %vm185, %v382, 0
  %v420 = vsel %vm185, %v388, 0
  %v422 = vsel %vm185, %v392, 0
  %424 = vmatprep.subr.mxu0 0.0
  %425 = vmatpush1.msra.mxu0 %v398
  %426 = vmatprep.subr.mxu0 0.0
  %427 = vmatpush1.msra.mxu0 %v399
  %428 = vmatprep.subr.mxu0 0.0
  %429 = vmatpush1.msra.mxu0 %v400
  %430 = vmatprep.subr.mxu0 0.0
  %431 = vmatpush1.msra.mxu0 %v401
  %432 = vmatprep.subr.mxu0 0.0
  %433 = vmatpush1.msra.mxu0 %v402
  %434 = vmatprep.subr.mxu0 0.0
  %435 = vmatpush1.msra.mxu0 %v403
  %436 = vmatprep.subr.mxu0 0.0
  %437 = vmatpush1.msra.mxu0 %v404
  %438 = vmatprep.subr.mxu0 0.0
  %439 = vmatpush1.msra.mxu0 %v405
  %440 = vmatprep.subr.mxu0 0.0
  %441 = vmatpush1.msra.mxu0 %v406
  %442 = vmatprep.subr.mxu0 0.0
  %443 = vmatpush1.msra.mxu0 %v407
  %444 = vmatprep.subr.mxu0 0.0
  %445 = vmatpush1.msra.mxu0 %v408
  %446 = vmatprep.subr.mxu0 0.0
  %447 = vmatpush1.msra.mxu0 %v409
  %448 = vmatprep.subr.mxu0 0.0
  %449 = vmatpush1.msra.mxu0 %v410
  %450 = vmatprep.subr.mxu0 0.0
  %451 = vmatpush1.msra.mxu0 %v411
  %452 = vmatprep.subr.mxu0 0.0
  %453 = vmatpush1.msra.mxu0 %v412
  %454 = vmatprep.subr.mxu0 0.0
  %455 = vmatpush1.msra.mxu0 %v413
  %456 = vmatprep.subr.mxu0 0.0
  %457 = vmatpush1.msra.mxu0 %v414
  %458 = vmatprep.subr.mxu0 0.0
  %459 = vmatpush1.msra.mxu0 %v415
  %460 = vmatprep.subr.mxu0 0.0
  %461 = vmatpush1.msra.mxu0 0.0
  %462 = vmatprep.subr.mxu0 0.0
  %463 = vmatpush1.msra.mxu0 0.0
  %464 = vmatprep.subr.mxu0 0.0
  %465 = vmatpush1.msra.mxu0 0.0
  %466 = vmatprep.subr.mxu0 0.0
  %467 = vmatpush1.msra.mxu0 0.0
  %468 = vmatprep.subr.mxu0 0.0
  %469 = vmatpush1.msra.mxu0 0.0
  %470 = vmatprep.subr.mxu0 0.0
  %471 = vmatpush1.msra.mxu0 0.0
  %472 = vmatprep.subr.mxu0 0.0
  %473 = vmatpush1.msra.mxu0 0.0
  %474 = vmatprep.subr.mxu0 0.0
  %475 = vmatpush1.msra.mxu0 0.0
  %476 = vmatprep.subr.mxu0 0.0
  %477 = vmatpush1.msra.mxu0 0.0
  %478 = vmatprep.subr.mxu0 0.0
  %479 = vmatpush1.msra.mxu0 0.0
  %480 = vmatprep.subr.mxu0 0.0
  %481 = vmatpush1.msra.mxu0 0.0
  %482 = vmatprep.subr.mxu0 0.0
  %483 = vmatpush1.msra.mxu0 0.0
  %484 = vmatprep.subr.mxu0 0.0
  %485 = vmatpush1.msra.mxu0 0.0
  %486 = vmatprep.subr.mxu0 0.0
  %487 = vmatpush1.msra.mxu0 0.0
  %488 = vmatprep.mubr.f32.mxu0 %v416
  %489 = vmatmul.mubr.f32.gmra.mrb[0].mxu0 %v375
  %v490 = vpop.f32.mrb[0].mxu0
  %v491 = vadd.f32 0.0, %v490
  %v492 = vpop.f32.mrb[0].mxu0
  %493 = vmatprep.mubr.f32.mxu0 %v418
  %494 = vmatmul.mubr.f32.gmra.mrb[0].mxu0 %v380
  %v495 = vpop.f32.mrb[0].mxu0
  %v496 = vadd.f32 0.0, %v495
  %v497 = vpop.f32.mrb[0].mxu0
  %498 = vmatprep.mubr.f32.mxu0 %v420
  %499 = vmatmul.mubr.f32.gmra.mrb[0].mxu0 %v385
  %v500 = vpop.f32.mrb[0].mxu0
  %v501 = vadd.f32 0.0, %v500
  %v502 = vpop.f32.mrb[0].mxu0
  %503 = vmatprep.mubr.f32.mxu0 %v422
  %504 = vmatmul.mubr.f32.gmra.mrb[0].mxu0 %v390
  %v505 = vpop.f32.mrb[0].mxu0
  %v506 = vadd.f32 0.0, %v505
  %v507 = vpop.f32.mrb[0].mxu0
  %508 = vdwg.mxu0
  %v509 = vadd.f32 %v354, %v491
  %v510 = vadd.f32 %v359, %v496
  %v511 = vadd.f32 %v364, %v501
  %v512 = vadd.f32 %v369, %v506
  %v513 = vld [vmem:[%s3] sm:$0x1]
  %v515 = vlaneseq
  %v516 = vshrl.u32 %v515, 7
  %v517 = vsub.s32 0, %v516
  %v518 = vrot.slane %v513, %v517
  %v520 = vadd.f32 %v509, %v518
  %v521 = vadd.f32 %v510, %v518
  %v522 = vadd.f32 %v511, %v518
  %v523 = vadd.f32 %v512, %v518
  %v524 = vld [vmem:[%s1] sm:$0xff]
  %v525 = vld [vmem:[%s1 + $0x8] sm:$0xff]
  %v526 = vld [vmem:[%s1 + $0x10] sm:$0xff]
  %v527 = vld [vmem:[%s1 + $0x18] sm:$0xff]
  %v528 = vand.u32 2147483647, %v524
  %v529 = vand.u32 2147483647, %v525
  %v530 = vand.u32 2147483647, %v526
  %v531 = vand.u32 2147483647, %v527
  %v532 = vsub.f32 0.0, %v528
  %v533 = vsub.f32 0.0, %v529
  %v534 = vsub.f32 0.0, %v530
  %v535 = vsub.f32 0.0, %v531
  %v536 = vmul.f32 %v532, 1.442695
  %v537 = vpow.pop %v536
  %v538 = vmul.f32 %v533, 1.442695
  %v539 = vpow.pop %v538
  %v540 = vmul.f32 %v534, 1.442695
  %v541 = vpow.pop %v540
  %v542 = vmul.f32 %v535, 1.442695
  %v543 = vpow.pop %v542
  %v544 = vsub.f32 %v537, 1.0
  %v545 = vsub.f32 %v539, 1.0
  %v546 = vsub.f32 %v541, 1.0
  %v547 = vsub.f32 %v543, 1.0
  %vm548 = vcmp.gt.f32.partialorder %v524, 0.0
  %vm549 = vcmp.gt.f32.partialorder %v525, 0.0
  %vm550 = vcmp.gt.f32.partialorder %v526, 0.0
  %vm551 = vcmp.gt.f32.partialorder %v527, 0.0
  %v552 = vsel %vm548, %v524, %v544
  %v553 = vsel %vm549, %v525, %v545
  %v554 = vsel %vm550, %v526, %v546
  %v555 = vsel %vm551, %v527, %v547
  %v556 = vsub.f32 0.0, %v524
  %v557 = vsub.f32 0.0, %v525
  %v558 = vsub.f32 0.0, %v526
  %v559 = vsub.f32 0.0, %v527
  %v560 = vsel %vm548, %v544, %v556
  %v561 = vsel %vm549, %v545, %v557
  %v562 = vsel %vm550, %v546, %v558
  %v563 = vsel %vm551, %v547, %v559
  %568 = vrot.lane.b32.xlu0 %v560, 48
  %v569 = vpop.permute.xlu0 %568
  %570 = vrot.lane.b32.xlu0 %v561, 48
  %v571 = vpop.permute.xlu0 %570
  %572 = vrot.lane.b32.xlu0 %v562, 48
  %v573 = vpop.permute.xlu0 %572
  %574 = vrot.lane.b32.xlu0 %v563, 48
  %v575 = vpop.permute.xlu0 %574
  %vm580 = vcmask 392192
  %v581 = vsel %vm580, %v552, %v569
  %v582 = vsel %vm580, %v553, %v571
  %v583 = vsel %vm580, %v554, %v573
  %v584 = vsel %vm580, %v555, %v575
  %v585 = vld [vmem:[%s4] sm:$0xff]
  %v586 = vld [vmem:[%s4 + $0x8] sm:$0xff]
  %v587 = vld [vmem:[%s4 + $0x10] sm:$0xff]
  %v588 = vld [vmem:[%s4 + $0x18] sm:$0xff]
  %v589 = vld [vmem:[%s4 + $0x20] sm:$0xff]
  %v590 = vld [vmem:[%s4 + $0x28] sm:$0xff]
  %v591 = vld [vmem:[%s4 + $0x30] sm:$0xff]
  %v592 = vld [vmem:[%s4 + $0x38] sm:$0xff]
  %v593 = vld [vmem:[%s4 + $0x40] sm:$0xff]
  %v594 = vld [vmem:[%s4 + $0x48] sm:$0xff]
  %v595 = vld [vmem:[%s4 + $0x50] sm:$0xff]
  %v596 = vld [vmem:[%s4 + $0x58] sm:$0xff]
  %vm597 = vcmask 785408
  %v599 = vsel %vm597, %v581, 0
  %v602 = vsel %vm597, %v582, 0
  %v605 = vsel %vm597, %v583, 0
  %v608 = vsel %vm597, %v584, 0
  %610 = vmatprep.subr.mxu0 0.0
  %611 = vmatpush1.msra.mxu0 %v585
  %612 = vmatprep.subr.mxu0 0.0
  %613 = vmatpush1.msra.mxu0 %v586
  %614 = vmatprep.subr.mxu0 0.0
  %615 = vmatpush1.msra.mxu0 %v587
  %616 = vmatprep.subr.mxu0 0.0
  %617 = vmatpush1.msra.mxu0 %v588
  %618 = vmatprep.subr.mxu0 0.0
  %619 = vmatpush1.msra.mxu0 %v589
  %620 = vmatprep.subr.mxu0 0.0
  %621 = vmatpush1.msra.mxu0 %v590
  %622 = vmatprep.subr.mxu0 0.0
  %623 = vmatpush1.msra.mxu0 %v591
  %624 = vmatprep.subr.mxu0 0.0
  %625 = vmatpush1.msra.mxu0 %v592
  %626 = vmatprep.subr.mxu0 0.0
  %627 = vmatpush1.msra.mxu0 %v593
  %628 = vmatprep.subr.mxu0 0.0
  %629 = vmatpush1.msra.mxu0 %v594
  %630 = vmatprep.subr.mxu0 0.0
  %631 = vmatpush1.msra.mxu0 %v595
  %632 = vmatprep.subr.mxu0 0.0
  %633 = vmatpush1.msra.mxu0 %v596
  %634 = vmatprep.subr.mxu0 0.0
  %635 = vmatpush1.msra.mxu0 0.0
  %636 = vmatprep.subr.mxu0 0.0
  %637 = vmatpush1.msra.mxu0 0.0
  %638 = vmatprep.subr.mxu0 0.0
  %639 = vmatpush1.msra.mxu0 0.0
  %640 = vmatprep.subr.mxu0 0.0
  %641 = vmatpush1.msra.mxu0 0.0
  %642 = vmatprep.subr.mxu0 0.0
  %643 = vmatpush1.msra.mxu0 0.0
  %644 = vmatprep.subr.mxu0 0.0
  %645 = vmatpush1.msra.mxu0 0.0
  %646 = vmatprep.subr.mxu0 0.0
  %647 = vmatpush1.msra.mxu0 0.0
  %648 = vmatprep.subr.mxu0 0.0
  %649 = vmatpush1.msra.mxu0 0.0
  %650 = vmatprep.subr.mxu0 0.0
  %651 = vmatpush1.msra.mxu0 0.0
  %652 = vmatprep.subr.mxu0 0.0
  %653 = vmatpush1.msra.mxu0 0.0
  %654 = vmatprep.subr.mxu0 0.0
  %655 = vmatpush1.msra.mxu0 0.0
  %656 = vmatprep.subr.mxu0 0.0
  %657 = vmatpush1.msra.mxu0 0.0
  %658 = vmatprep.subr.mxu0 0.0
  %659 = vmatpush1.msra.mxu0 0.0
  %660 = vmatprep.subr.mxu0 0.0
  %661 = vmatpush1.msra.mxu0 0.0
  %662 = vmatprep.subr.mxu0 0.0
  %663 = vmatpush1.msra.mxu0 0.0
  %664 = vmatprep.subr.mxu0 0.0
  %665 = vmatpush1.msra.mxu0 0.0
  %666 = vmatprep.subr.mxu0 0.0
  %667 = vmatpush1.msra.mxu0 0.0
  %668 = vmatprep.subr.mxu0 0.0
  %669 = vmatpush1.msra.mxu0 0.0
  %670 = vmatprep.subr.mxu0 0.0
  %671 = vmatpush1.msra.mxu0 0.0
  %672 = vmatprep.subr.mxu0 0.0
  %673 = vmatpush1.msra.mxu0 0.0
  %674 = vmatprep.mubr.f32.mxu0 0.0
  %675 = vmatmul.mubr.f32.gmra.mrb[0].mxu0 %v599
  %v676 = vpop.f32.mrb[0].mxu0
  %v677 = vadd.f32 0.0, %v676
  %v678 = vpop.f32.mrb[0].mxu0
  %679 = vmatprep.mubr.f32.mxu0 0.0
  %680 = vmatmul.mubr.f32.gmra.mrb[0].mxu0 %v602
  %v681 = vpop.f32.mrb[0].mxu0
  %v682 = vadd.f32 0.0, %v681
  %v683 = vpop.f32.mrb[0].mxu0
  %684 = vmatprep.mubr.f32.mxu0 0.0
  %685 = vmatmul.mubr.f32.gmra.mrb[0].mxu0 %v605
  %v686 = vpop.f32.mrb[0].mxu0
  %v687 = vadd.f32 0.0, %v686
  %v688 = vpop.f32.mrb[0].mxu0
  %689 = vmatprep.mubr.f32.mxu0 0.0
  %690 = vmatmul.mubr.f32.gmra.mrb[0].mxu0 %v608
  %v691 = vpop.f32.mrb[0].mxu0
  %v692 = vadd.f32 0.0, %v691
  %v693 = vpop.f32.mrb[0].mxu0
  %694 = vdwg.mxu0
  %v695 = vadd.f32 %v520, %v677
  %v696 = vadd.f32 %v521, %v682
  %v697 = vadd.f32 %v522, %v687
  %v698 = vadd.f32 %v523, %v692
  %v699 = vand.u32 2147483647, %v695
  %v700 = vand.u32 2147483647, %v696
  %v701 = vand.u32 2147483647, %v697
  %v702 = vand.u32 2147483647, %v698
  %v703 = vsub.f32 0.0, %v699
  %v704 = vsub.f32 0.0, %v700
  %v705 = vsub.f32 0.0, %v701
  %v706 = vsub.f32 0.0, %v702
  %v707 = vmul.f32 %v703, 1.442695
  %v708 = vpow.pop %v707
  %v709 = vmul.f32 %v704, 1.442695
  %v710 = vpow.pop %v709
  %v711 = vmul.f32 %v705, 1.442695
  %v712 = vpow.pop %v711
  %v713 = vmul.f32 %v706, 1.442695
  %v714 = vpow.pop %v713
  %v715 = vsub.f32 %v708, 1.0
  %v716 = vsub.f32 %v710, 1.0
  %v717 = vsub.f32 %v712, 1.0
  %v718 = vsub.f32 %v714, 1.0
  %vm719 = vcmp.gt.f32.partialorder %v695, 0.0
  %vm720 = vcmp.gt.f32.partialorder %v696, 0.0
  %vm721 = vcmp.gt.f32.partialorder %v697, 0.0
  %vm722 = vcmp.gt.f32.partialorder %v698, 0.0
  %v723 = vsel %vm719, %v695, %v715
  %v724 = vsel %vm720, %v696, %v716
  %v725 = vsel %vm721, %v697, %v717
  %v726 = vsel %vm722, %v698, %v718
  %v727 = vsub.f32 0.0, %v695
  %v728 = vsub.f32 0.0, %v696
  %v729 = vsub.f32 0.0, %v697
  %v730 = vsub.f32 0.0, %v698
  %v731 = vsel %vm719, %v715, %v727
  %v732 = vsel %vm720, %v716, %v728
  %v733 = vsel %vm721, %v717, %v729
  %v734 = vsel %vm722, %v718, %v730
  %739 = vrot.lane.b32.xlu0 %v731, 64
  %v740 = vpop.permute.xlu0 %739
  %741 = vrot.lane.b32.xlu0 %v732, 64
  %v742 = vpop.permute.xlu0 %741
  %743 = vrot.lane.b32.xlu0 %v733, 64
  %v744 = vpop.permute.xlu0 %743
  %745 = vrot.lane.b32.xlu0 %v734, 64
  %v746 = vpop.permute.xlu0 %745
  %vm751 = vcmask 523264
  %v752 = vsel %vm751, %v723, %v740
  %v753 = vsel %vm751, %v724, %v742
  %v754 = vsel %vm751, %v725, %v744
  %v755 = vsel %vm751, %v726, %v746
  %v756 = vld [vmem:[%s5] sm:$0xff]
  %v757 = vld [vmem:[%s5 + $0x8] sm:$0xff]
  %v758 = vld [vmem:[%s5 + $0x10] sm:$0xff]
  %v759 = vld [vmem:[%s5 + $0x18] sm:$0xff]
  %v760 = vld [vmem:[%s5 + $0x20] sm:$0xff]
  %v761 = vld [vmem:[%s5 + $0x28] sm:$0xff]
  %v762 = vld [vmem:[%s5 + $0x30] sm:$0xff]
  %v763 = vld [vmem:[%s5 + $0x38] sm:$0xff]
  %v764 = vld [vmem:[%s5 + $0x40] sm:$0xff]
  %v765 = vld [vmem:[%s5 + $0x48] sm:$0xff]
  %v766 = vld [vmem:[%s5 + $0x50] sm:$0xff]
  %v767 = vld [vmem:[%s5 + $0x58] sm:$0xff]
  %v768 = vld [vmem:[%s5 + $0x60] sm:$0xff]
  %v769 = vld [vmem:[%s5 + $0x68] sm:$0xff]
  %v770 = vld [vmem:[%s5 + $0x70] sm:$0xff]
  %v771 = vld [vmem:[%s5 + $0x78] sm:$0xff]
  %v772 = vld [vmem:[%s6] sm:$0x1]
  %v774 = vlaneseq
  %v775 = vshrl.u32 %v774, 7
  %v776 = vsub.s32 0, %v775
  %v777 = vrot.slane %v772, %v776
  %779 = vmatprep.subr.mxu0 0.0
  %780 = vmatpush1.msra.mxu0 %v756
  %781 = vmatprep.subr.mxu0 0.0
  %782 = vmatpush1.msra.mxu0 %v757
  %783 = vmatprep.subr.mxu0 0.0
  %784 = vmatpush1.msra.mxu0 %v758
  %785 = vmatprep.subr.mxu0 0.0
  %786 = vmatpush1.msra.mxu0 %v759
  %787 = vmatprep.subr.mxu0 0.0
  %788 = vmatpush1.msra.mxu0 %v760
  %789 = vmatprep.subr.mxu0 0.0
  %790 = vmatpush1.msra.mxu0 %v761
  %791 = vmatprep.subr.mxu0 0.0
  %792 = vmatpush1.msra.mxu0 %v762
  %793 = vmatprep.subr.mxu0 0.0
  %794 = vmatpush1.msra.mxu0 %v763
  %795 = vmatprep.subr.mxu0 0.0
  %796 = vmatpush1.msra.mxu0 %v764
  %797 = vmatprep.subr.mxu0 0.0
  %798 = vmatpush1.msra.mxu0 %v765
  %799 = vmatprep.subr.mxu0 0.0
  %800 = vmatpush1.msra.mxu0 %v766
  %801 = vmatprep.subr.mxu0 0.0
  %802 = vmatpush1.msra.mxu0 %v767
  %803 = vmatprep.subr.mxu0 0.0
  %804 = vmatpush1.msra.mxu0 %v768
  %805 = vmatprep.subr.mxu0 0.0
  %806 = vmatpush1.msra.mxu0 %v769
  %807 = vmatprep.subr.mxu0 0.0
  %808 = vmatpush1.msra.mxu0 %v770
  %809 = vmatprep.subr.mxu0 0.0
  %810 = vmatpush1.msra.mxu0 %v771
  %811 = vmatprep.subr.mxu0 0.0
  %812 = vmatpush1.msra.mxu0 0.0
  %813 = vmatprep.subr.mxu0 0.0
  %814 = vmatpush1.msra.mxu0 0.0
  %815 = vmatprep.subr.mxu0 0.0
  %816 = vmatpush1.msra.mxu0 0.0
  %817 = vmatprep.subr.mxu0 0.0
  %818 = vmatpush1.msra.mxu0 0.0
  %819 = vmatprep.subr.mxu0 0.0
  %820 = vmatpush1.msra.mxu0 0.0
  %821 = vmatprep.subr.mxu0 0.0
  %822 = vmatpush1.msra.mxu0 0.0
  %823 = vmatprep.subr.mxu0 0.0
  %824 = vmatpush1.msra.mxu0 0.0
  %825 = vmatprep.subr.mxu0 0.0
  %826 = vmatpush1.msra.mxu0 0.0
  %827 = vmatprep.subr.mxu0 0.0
  %828 = vmatpush1.msra.mxu0 0.0
  %829 = vmatprep.subr.mxu0 0.0
  %830 = vmatpush1.msra.mxu0 0.0
  %831 = vmatprep.subr.mxu0 0.0
  %832 = vmatpush1.msra.mxu0 0.0
  %833 = vmatprep.subr.mxu0 0.0
  %834 = vmatpush1.msra.mxu0 0.0
  %835 = vmatprep.subr.mxu0 0.0
  %836 = vmatpush1.msra.mxu0 0.0
  %837 = vmatprep.subr.mxu0 0.0
  %838 = vmatpush1.msra.mxu0 0.0
  %839 = vmatprep.subr.mxu0 0.0
  %840 = vmatpush1.msra.mxu0 0.0
  %841 = vmatprep.subr.mxu0 0.0
  %842 = vmatpush1.msra.mxu0 0.0
  %843 = vmatprep.mubr.f32.mxu0 0.0
  %844 = vmatmul.mubr.f32.gmra.mrb[0].mxu0 %v752
  %v845 = vpop.f32.mrb[0].mxu0
  %v846 = vadd.f32 %v777, %v845
  %v847 = vpop.f32.mrb[0].mxu0
  %848 = vmatprep.mubr.f32.mxu0 0.0
  %849 = vmatmul.mubr.f32.gmra.mrb[0].mxu0 %v753
  %v850 = vpop.f32.mrb[0].mxu0
  %v851 = vadd.f32 %v777, %v850
  %v852 = vpop.f32.mrb[0].mxu0
  %853 = vmatprep.mubr.f32.mxu0 0.0
  %854 = vmatmul.mubr.f32.gmra.mrb[0].mxu0 %v754
  %v855 = vpop.f32.mrb[0].mxu0
  %v856 = vadd.f32 %v777, %v855
  %v857 = vpop.f32.mrb[0].mxu0
  %858 = vmatprep.mubr.f32.mxu0 0.0
  %859 = vmatmul.mubr.f32.gmra.mrb[0].mxu0 %v755
  %v860 = vpop.f32.mrb[0].mxu0
  %v861 = vadd.f32 %v777, %v860
  %v862 = vpop.f32.mrb[0].mxu0
  %863 = vdwg.mxu0
  %v864 = vsub.f32 0.0, %v846
  %v865 = vsub.f32 0.0, %v851
  %v866 = vsub.f32 0.0, %v856
  %v867 = vsub.f32 0.0, %v861
  %v868 = vmul.f32 %v864, 1.442695
  %v869 = vpow.pop %v868
  %v870 = vmul.f32 %v865, 1.442695
  %v871 = vpow.pop %v870
  %v872 = vmul.f32 %v866, 1.442695
  %v873 = vpow.pop %v872
  %v874 = vmul.f32 %v867, 1.442695
  %v875 = vpow.pop %v874
  %v876 = vadd.f32 %v869, 1.0
  %v877 = vadd.f32 %v871, 1.0
  %v878 = vadd.f32 %v873, 1.0
  %v879 = vadd.f32 %v875, 1.0
  %884 = vrot.lane.b32.xlu0 %v876, 64
  %v885 = vpop.permute.xlu0 %884
  %886 = vrot.lane.b32.xlu0 %v877, 64
  %v887 = vpop.permute.xlu0 %886
  %888 = vrot.lane.b32.xlu0 %v878, 64
  %v889 = vpop.permute.xlu0 %888
  %890 = vrot.lane.b32.xlu0 %v879, 64
  %v891 = vpop.permute.xlu0 %890
  %v896 = vrcp.pop %v885
  %v897 = vmul.f32 %v846, %v896
  %v898 = vrcp.pop %v887
  %v899 = vmul.f32 %v851, %v898
  %v900 = vrcp.pop %v889
  %v901 = vmul.f32 %v856, %v900
  %v902 = vrcp.pop %v891
  %v903 = vmul.f32 %v861, %v902
  %904 = vst.msk [vmem:[%s7] sm:$0xff] %vm751, %v897
  %905 = vst.msk [vmem:[%s7 + $0x8] sm:$0xff] %vm751, %v899
  %906 = vst.msk [vmem:[%s7 + $0x10] sm:$0xff] %vm751, %v901
  %907 = vst.msk [vmem:[%s7 + $0x18] sm:$0xff] %vm751, %v903
  // Predicated region
  $region30: #{gated_conv.1} parent=0 // pred_check
    _
  $region31: #{gated_conv.1} parent=0 // pred_check_branch
    %909 = sbr.rel (0) target = $region33
  $region32: #{gated_conv.1} parent=0 // pred_region
    _
  $region33: #{gated_conv.1} parent=0 // pred_fallthru
    _
  // Predicated region
  $region34: #{gated_conv.1} parent=0 // pred_check
    _
  $region35: #{gated_conv.1} parent=0 // pred_check_branch
    %911 = sbr.rel (0) target = $region37
  $region36: #{gated_conv.1} parent=0 // pred_region
    _
  $region37: #{gated_conv.1} parent=0 // pred_fallthru
    _

</llo_original>
